<compile_context>
chip_gen: v6e
topology: v6e:2x2x1
jax: 0.10.0
libtpu: 0.0.40
codegen_flags: <defaults>
</compile_context>

<pallas_src>
import functools
import math

import jax
import jax.numpy as jnp
from jax import lax
from jax.experimental import pallas as pl
from jax.experimental.pallas import tpu as pltpu


def _s32(v: int) -> int:
    """Reinterpret a 32-bit pattern as a signed int32 Python int."""
    v &= 0xFFFFFFFF
    return v - (1 << 32) if v & 0x80000000 else v


# Odd 32-bit mixing constants (xxhash / splitmix style), as signed int32.
_C_SEQ = _s32(0x9E3779B1)
_C_BAT = _s32(0x85EBCA77)
_C_DIM = _s32(0xC2B2AE3D)
_C_M1 = _s32(0x7FEB352D)
_C_M2 = _s32(0x846CA68B)


def make_positional_encoding_table(d_model: int, max_len: int = 5000) -> jnp.ndarray:
    """Deterministic pe buffer, same formula as the PyTorch __init__."""
    position = jnp.arange(max_len, dtype=jnp.float32)[:, None]          # (max_len, 1)
    div_term = jnp.exp(
        jnp.arange(0, d_model, 2, dtype=jnp.float32) * (-math.log(10000.0) / d_model)
    )
    angles = position * div_term                                         # (max_len, d_model//2)
    pe = jnp.zeros((max_len, 1, d_model), dtype=jnp.float32)
    pe = pe.at[:, 0, 0::2].set(jnp.sin(angles))
    pe = pe.at[:, 0, 1::2].set(jnp.cos(angles))
    return pe


def _lsr32(h, n):
    """Logical right shift of an int32 bit pattern (arith shift + mask)."""
    return (h >> n) & ((1 << (32 - n)) - 1)


def _pe_dropout_kernel(seed_ref, x_ref, pe_ref, o_ref, *, p: float, training: bool, ts: int):
    # x_ref / o_ref: (B, TS, D)   pe_ref: (TS, D)   seed_ref: (1,) int32 in SMEM
    x = x_ref[...]
    y = x + pe_ref[...][None, :, :]      # broadcast over the batch axis

    if training and p > 0.0:
        # Inverted dropout.  TODO(synk): RNG stream differs from
        # torch.nn.Dropout's; semantics (Bernoulli keep + 1/(1-p) scale) match.
        shape = y.shape
        b_idx = lax.broadcasted_iota(jnp.int32, shape, 0)
        s_idx = lax.broadcasted_iota(jnp.int32, shape, 1)
        d_idx = lax.broadcasted_iota(jnp.int32, shape, 2)
        # Global sequence row -> each grid tile gets a distinct random stream.
        gs = s_idx + pl.program_id(0) * ts
        h = seed_ref[0] ^ (gs * _C_SEQ) ^ (b_idx * _C_BAT) ^ (d_idx * _C_DIM)
        # splitmix32-style avalanche (int32 wraparound == uint32 math bitwise).
        h = (h ^ _lsr32(h, 16)) * _C_M1
        h = (h ^ _lsr32(h, 15)) * _C_M2
        h = h ^ _lsr32(h, 16)
        # Keep iff the low 24 uniform bits clear an integer threshold
        # (no int->float convert; quantization error is 2^-24).
        thresh = int(round(p * float(1 << 24)))
        keep = (h & 0x00FFFFFF) >= thresh
        y = jnp.where(keep, y * (1.0 / (1.0 - p)), 0.0)

    o_ref[...] = y.astype(o_ref.dtype)


def positional_encoding_forward(x, pe, *, p: float = 0.1, training: bool = True, seed: int = 0):
    """x: (seq_len, batch, d_model).  Returns same shape/dtype."""
    S, B, D = x.shape

    # (B, S, D) layout presents lane/sublane-dense (TS, D) blocks to the VPU
    # (d_model on lanes, sequence rows on sublanes) independent of batch size.
    x_t = jnp.transpose(x, (1, 0, 2))
    pe_s = pe[:S, 0, :].astype(x.dtype)                 # (S, D), x's dtype
    seed_arr = jnp.array([seed], dtype=jnp.int32)

    # Tile the sequence axis so auto-pipelining overlaps HBM DMA with compute.
    # Budget ~2 MiB per x tile -> double-buffered x + out + pe stays well under
    # VMEM limits on v5e/v6e and on v7x (64 MiB physical).
    bytes_per_row = B * D * jnp.dtype(x.dtype).itemsize
    ts = int(min(S, max(8, ((2 * 1024 * 1024) // max(bytes_per_row, 1)) // 8 * 8)))
    grid = (pl.cdiv(S, ts),)

    kernel = functools.partial(_pe_dropout_kernel, p=float(p),
                               training=bool(training), ts=ts)

    out_t = pl.pallas_call(
        kernel,
        out_shape=jax.ShapeDtypeStruct((B, S, D), x.dtype),
        grid=grid,
        in_specs=[
            pl.BlockSpec(memory_space=pltpu.MemorySpace.SMEM),   # seed scalar
            pl.BlockSpec((B, ts, D), lambda i: (0, i, 0)),       # x  (B, S, D)
            pl.BlockSpec((ts, D), lambda i: (i, 0)),             # pe (S, D)
        ],
        out_specs=pl.BlockSpec((B, ts, D), lambda i: (0, i, 0)),
        compiler_params=pltpu.CompilerParams(
            dimension_semantics=("parallel",),          # shard tiles across TCs (v7x)
            vmem_limit_bytes=32 * 1024 * 1024,
        ),
    )(seed_arr, x_t, pe_s)

    return jnp.transpose(out_t, (1, 0, 2))


if __name__ == "__main__":
    seq_len, batch, d_model = 8, 2, 32
    max_len = 64
    p = 0.2   # module-level `dropout = 0.2` in the spec

    key = jax.random.PRNGKey(0)
    x = jax.random.normal(key, (seq_len, batch, d_model), dtype=jnp.float32)
    pe = make_positional_encoding_table(d_model, max_len)
    ref = x + pe[:seq_len]

    # Eval mode (dropout disabled): exact match with the reference add.
    y_eval = jax.block_until_ready(
        positional_encoding_forward(x, pe, p=p, training=False))
    assert y_eval.shape == (seq_len, batch, d_model)
    assert jnp.allclose(y_eval, ref, atol=1e-6), "eval-mode mismatch vs reference"

    # Training mode (in-kernel dropout): surviving elements equal ref/(1-p),
    # dropped elements are exactly zero, drop rate is plausible.
    y_train = jax.block_until_ready(
        positional_encoding_forward(x, pe, p=p, training=True, seed=1234))
    assert y_train.shape == (seq_len, batch, d_model)
    kept = y_train != 0.0
    assert jnp.allclose(jnp.where(kept, y_train, 0.0),
                        jnp.where(kept, ref / (1.0 - p), 0.0), atol=1e-5)
    drop_frac = float(1.0 - jnp.mean(kept.astype(jnp.float32)))
    assert 0.02 < drop_frac < 0.6, f"implausible dropout rate {drop_frac}"

    print("KERNEL_OK")
</pallas_src>

<mosaic_0001>
module attributes {stable_mosaic.version = 11 : i64} {
  func.func @_pe_dropout_kernel(%arg0: i32, %arg1: memref<1xi32, #tpu.memory_space<smem>>, %arg2: memref<2x8x32xf32, #tpu.memory_space<vmem>>, %arg3: memref<8x32xf32, #tpu.memory_space<vmem>>, %arg4: memref<2x8x32xf32, #tpu.memory_space<vmem>>) attributes {dimension_semantics = [#tpu.dimension_semantics<parallel>], iteration_bounds = array<i64: 1>, scalar_prefetch = 0 : i64, scratch_operands = 0 : i64, tpu.core_type = #tpu.core_type<tc>, window_params = [{transform_indices = @transform_0, window_bounds = array<i64: 1>}, {transform_indices = @transform_1, window_bounds = array<i64: 2, 8, 32>}, {transform_indices = @transform_2, window_bounds = array<i64: 8, 32>}, {transform_indices = @transform_3, window_bounds = array<i64: 2, 8, 32>}]} {
    %c0 = arith.constant 0 : index
    %c0_0 = arith.constant 0 : index
    %c0_1 = arith.constant 0 : index
    %0 = vector.load %arg2[%c0, %c0_0, %c0_1] : memref<2x8x32xf32, #tpu.memory_space<vmem>>, vector<2x8x32xf32>
    %c0_2 = arith.constant 0 : index
    %c0_3 = arith.constant 0 : index
    %1 = vector.load %arg3[%c0_2, %c0_3] : memref<8x32xf32, #tpu.memory_space<vmem>>, vector<8x32xf32>
    %2 = vector.shape_cast %1 : vector<8x32xf32> to vector<1x8x32xf32>
    %3 = vector.broadcast %2 : vector<1x8x32xf32> to vector<2x8x32xf32>
    %4 = arith.addf %0, %3 : vector<2x8x32xf32>
    %c0_4 = arith.constant 0 : index
    %c0_5 = arith.constant 0 : index
    %c0_6 = arith.constant 0 : index
    %5 = vector.load %arg4[%c0_4, %c0_5, %c0_6] : memref<2x8x32xf32, #tpu.memory_space<vmem>>, vector<2x8x32xf32>
    tpu.vector_store %arg4[%c0_4, %c0_5, %c0_6], %4 {strides = array<i32>} : memref<2x8x32xf32, #tpu.memory_space<vmem>>, vector<2x8x32xf32>,
    return
  }
  func.func @transform_0(%arg0: i32) -> i32 {
    %c0_i32 = arith.constant 0 : i32
    %c0_i32_0 = arith.constant 0 : i32
    return %c0_i32 : i32
  }
  func.func @transform_1(%arg0: i32) -> (i32, i32, i32) {
    %c0_i32 = arith.constant 0 : i32
    %c0_i32_0 = arith.constant 0 : i32
    %c0_i32_1 = arith.constant 0 : i32
    return %c0_i32, %arg0, %c0_i32_0 : i32, i32, i32
  }
  func.func @transform_2(%arg0: i32) -> (i32, i32) {
    %c0_i32 = arith.constant 0 : i32
    %c0_i32_0 = arith.constant 0 : i32
    return %arg0, %c0_i32 : i32, i32
  }
  func.func @transform_3(%arg0: i32) -> (i32, i32, i32) {
    %c0_i32 = arith.constant 0 : i32
    %c0_i32_0 = arith.constant 0 : i32
    %c0_i32_1 = arith.constant 0 : i32
    return %c0_i32, %arg0, %c0_i32_0 : i32, i32, i32
  }
}

</mosaic_0001>

<llo_original>
// kernel: tpu_custom_call.1
$region0: #{tpu_custom_call.1}
  #allocation0 [shape = 'u32[]', space=smem, size = 0x4, offset = 0x4, fixed_abs, tag = 'smem constant byte address 0x4 - core index']
  #allocation1 [shape = 'u32[144,128]{1,0:T(1,128)}', space=vmem, size = 0x12000, scoped, tag = 'internal scratch']
  #allocation2 [shape = 's32[1]{0:T(128)S(6)}', space=smem, size = 0x200, scoped, tag = 'scoped memory for tpu_custom_call.1']
  %s0 = inlined_call_operand.<no memory space> [shape: s32[1], index: 0, kind: input, shape index: {}]
  %s1 = inlined_call_operand.hbm [shape: f32[2,8,32], index: 1, kind: input, shape index: {}]
  %s2 = inlined_call_operand.hbm [shape: f32[8,32], index: 2, kind: input, shape index: {}]
  %s3 = inlined_call_operand.hbm [shape: f32[2,8,32], index: 3, kind: output, shape index: {}]
  %s4 = sld [smem:[#allocation0]]
  $region30: #{tpu_custom_call.1} parent=0
    _
  %s6 = ssub.s32 1, %s4
  %s7 = scalar_select 0, %s6, %s4
  %8 = sst [smem:[#allocation2]] %s0
  $region1: #{tpu_custom_call.1} parent=0
    #allocation3 [shape = 'u8[8192]{0}', space=vmem, size = 0x2000, scoped, tag = 'input window, operand 1, single buffered']
    #allocation4 [shape = 's32[1]{0}', space=sflag, size = 0x4, scoped, tag = 'scoped memory for tpu_custom_call.1']
    #allocation5 [shape = 's32[1]{0}', space=sflag, size = 0x4, scoped, tag = 'scoped memory for tpu_custom_call.1']
    #allocation6 [shape = 'u8[4096]{0}', space=vmem, size = 0x1000, scoped, tag = 'input window, operand 2, single buffered']
    #allocation7 [shape = 's32[1]{0}', space=sflag, size = 0x4, scoped, tag = 'scoped memory for tpu_custom_call.1']
    #allocation8 [shape = 'u8[8192]{0}', space=vmem, size = 0x2000, scoped, tag = 'output window, operand 0, single buffered']
    %9 = vsyncpa [#allocation4], 0
    %10 = vsyncpa [#allocation7], 0
    %11 = vsyncpa [#allocation5], 0
    // Predicated region
    $region2: #{tpu_custom_call.1} parent=1 // pred_check
      _
    $region3: #{tpu_custom_call.1} parent=1 // pred_check_branch
      %13 = sbr.rel (0) target = $region5
    $region4: #{tpu_custom_call.1} parent=1 // pred_region
      _
    $region5: #{tpu_custom_call.1} parent=1 // pred_fallthru
      _
    // Predicated region
    $region6: #{tpu_custom_call.1} parent=1 // pred_check
      _
    $region7: #{tpu_custom_call.1} parent=1 // pred_check_branch
      %15 = sbr.rel (0) target = $region9
    $region8: #{tpu_custom_call.1} parent=1 // pred_region
      %s17 = ssub.s32 256, 256
      %18 = vsyncadd [#allocation4], %s17
      %s19 = sshll.u32 [#allocation3], 4
      %s20 = int_to_ptr.vmem [resolvable:$true] %s19
      %25 = dma.hbm_to_vmem [thread:$0]  %s1, 256, %s20, [#allocation4], 128, 128, 8
    $region9: #{tpu_custom_call.1} parent=1 // pred_fallthru
      _
    // Predicated region
    $region10: #{tpu_custom_call.1} parent=1 // pred_check
      _
    $region11: #{tpu_custom_call.1} parent=1 // pred_check_branch
      %27 = sbr.rel (0) target = $region13
    $region12: #{tpu_custom_call.1} parent=1 // pred_region
      %s29 = ssub.s32 128, 128
      %30 = vsyncadd [#allocation7], %s29
      %s32 = sshll.u32 [#allocation6], 4
      %s33 = int_to_ptr.vmem [resolvable:$true] %s32
      %35 = dma.hbm_to_vmem [thread:$0]  %s2, 128, %s33, [#allocation7]
    $region13: #{tpu_custom_call.1} parent=1 // pred_fallthru
      _
    // Predicated region
    $region14: #{tpu_custom_call.1} parent=1 // pred_check
      _
    $region15: #{tpu_custom_call.1} parent=1 // pred_check_branch
      %37 = sbr.rel (0) target = $region17
    $region16: #{tpu_custom_call.1} parent=1 // pred_region
      %38 = dma.done [#allocation4], 256
    $region17: #{tpu_custom_call.1} parent=1 // pred_fallthru
      _
    // Predicated region
    $region18: #{tpu_custom_call.1} parent=1 // pred_check
      _
    $region19: #{tpu_custom_call.1} parent=1 // pred_check_branch
      %40 = sbr.rel (0) target = $region21
    $region20: #{tpu_custom_call.1} parent=1 // pred_region
      %41 = dma.done [#allocation7], 128
    $region21: #{tpu_custom_call.1} parent=1 // pred_fallthru
      _
    %v42 = vld [vmem:[#allocation3] sm:$0xff]
    %v43 = vld [vmem:[#allocation3 + $0x8] sm:$0xff]
    %v44 = vld [vmem:[#allocation6] sm:$0xff]
    %v45 = vadd.f32 %v42, %v44
    %v46 = vadd.f32 %v43, %v44
    %vm47 = vcmask 261120
    %48 = vst.msk [vmem:[#allocation8] sm:$0xff] %vm47, %v45
    %49 = vst.msk [vmem:[#allocation8 + $0x8] sm:$0xff] %vm47, %v46
    // Predicated region
    $region22: #{tpu_custom_call.1} parent=1 // pred_check
      _
    $region23: #{tpu_custom_call.1} parent=1 // pred_check_branch
      %51 = sbr.rel (0) target = $region25
    $region24: #{tpu_custom_call.1} parent=1 // pred_region
      %s53 = ssub.s32 256, 256
      %54 = vsyncadd [#allocation5], %s53
      %s55 = sshll.u32 [#allocation8], 4
      %s56 = int_to_ptr.vmem [resolvable:$true] %s55
      %61 = dma.vmem_to_hbm [thread:$0]  %s56, 256, %s3, [#allocation5], 128, 128, 8
    $region25: #{tpu_custom_call.1} parent=1 // pred_fallthru
      _
    // Predicated region
    $region26: #{tpu_custom_call.1} parent=1 // pred_check
      _
    $region27: #{tpu_custom_call.1} parent=1 // pred_check_branch
      %63 = sbr.rel (0) target = $region29
    $region28: #{tpu_custom_call.1} parent=1 // pred_region
      %64 = dma.done [#allocation5], 256
    $region29: #{tpu_custom_call.1} parent=1 // pred_fallthru
      _
    %65 = vsyncpa [#allocation4], 1
    %66 = vsyncpa [#allocation7], 1
    %67 = vsyncpa [#allocation5], 1

</llo_original>
